<compile_context>
chip_gen: v7x
topology: tpu7x:2x2x1
jax: 0.10.0
libtpu: 0.0.40
codegen_flags: <defaults>
</compile_context>

<pallas_src>
import functools

import jax
import jax.numpy as jnp
from jax import lax
from jax.experimental import pallas as pl
from jax.experimental.pallas import tpu as pltpu

_NEG_LARGE = -1e30  # finite "-inf" sentinel (avoids inf-inf NaNs in the online update)


def _round_up(x, m):
    return (x + m - 1) // m * m


def _attention_aggregator_kernel(
    x_ref, w_ref,                       # inputs (VMEM tiles)
    m_out, l_out, acc_out,              # per-split partial outputs
    m_sc, l_sc, acc_sc,                 # VMEM scratch accumulators
    *, tiles_per_split, tile_n, n_rows, needs_mask,
):
    t = pl.program_id(1)                # tile index within this split (reduction axis)

    @pl.when(t == 0)
    def _init():
        m_sc[...] = jnp.full_like(m_sc, _NEG_LARGE)
        l_sc[...] = jnp.zeros_like(l_sc)
        acc_sc[...] = jnp.zeros_like(acc_sc)

    x = x_ref[...]                      # (tile_n, d_pad), native dtype (no upcast)
    w = w_ref[...]                      # (d_pad, 1)

    if needs_mask:
        s = pl.program_id(0)
        row0 = (s * tiles_per_split + t) * tile_n
        rows = row0 + lax.broadcasted_iota(jnp.int32, (tile_n, 1), 0)
        valid = rows < n_rows           # (tile_n, 1)
        x = jnp.where(valid, x, jnp.zeros_like(x))

    # Scores on the MXU with f32 accumulation.  (The Linear bias is omitted:
    # softmax is shift-invariant, so a scalar bias has no effect on the output.)
    scores = jnp.dot(x, w, preferred_element_type=jnp.float32)   # (tile_n, 1)
    if needs_mask:
        scores = jnp.where(valid, scores, jnp.full_like(scores, _NEG_LARGE))

    # Online-softmax update.
    m_prev = m_sc[...]                                           # (1, 1)
    m_new = jnp.maximum(m_prev, jnp.max(scores, axis=0, keepdims=True))
    alpha = jnp.exp(m_prev - m_new)                              # (1, 1)
    p = jnp.exp(scores - m_new)                                  # (tile_n, 1) f32
    if needs_mask:
        p = jnp.where(valid, p, jnp.zeros_like(p))

    l_sc[...] = alpha * l_sc[...] + jnp.sum(p, axis=0, keepdims=True)

    # Weighted sum: contract the tile_n axis on the MXU -> (1, d_pad).
    contrib = lax.dot_general(
        p.astype(x.dtype), x,
        dimension_numbers=(((0,), (0,)), ((), ())),
        preferred_element_type=jnp.float32,
    )
    acc_sc[...] = alpha * acc_sc[...] + contrib
    m_sc[...] = m_new

    @pl.when(t == tiles_per_split - 1)
    def _finalize():
        m_out[0] = m_sc[...]
        l_out[0] = l_sc[...]
        acc_out[0] = acc_sc[...]


def attention_aggregator(embeddings, weight, bias=None, *,
                         tile_n=512, num_splits=2):
    """embeddings: (N, D); weight: (D, 1); bias: scalar (accepted for API parity
    with nn.Linear, but a scalar bias under softmax(dim=0) is a provable no-op).
    Returns the aggregated (D,) embedding."""
    del bias  # softmax is shift-invariant -> scalar bias cancels exactly
    n, d = embeddings.shape
    assert weight.shape == (d, 1)
    out_dtype = embeddings.dtype

    # Lane-dense layout: pad D to a multiple of 128 (unmasked vector stores).
    d_pad = _round_up(max(d, 128), 128)
    if d_pad != d:
        embeddings = jnp.pad(embeddings, ((0, 0), (0, d_pad - d)))
        weight = jnp.pad(weight, ((0, d_pad - d), (0, 0)))

    # Tile N; keep the (double-buffered) input tiles well inside the scoped-VMEM
    # budget of the smallest targets (v7x 64 MiB physical, v5e 16 MiB scoped).
    itemsize = jnp.dtype(embeddings.dtype).itemsize
    vmem_budget = 8 * 1024 * 1024
    cap = max(8, (vmem_budget // (2 * d_pad * itemsize)) // 8 * 8)
    tile_n = min(tile_n, cap)
    if tile_n >= n:
        tile_n = n                       # single full-extent block is always legal
    else:
        tile_n = max(8, (tile_n // 8) * 8)

    num_tiles = pl.cdiv(n, tile_n)
    num_splits = max(1, min(num_splits, num_tiles))
    tiles_per_split = pl.cdiv(num_tiles, num_splits)
    num_splits = pl.cdiv(num_tiles, tiles_per_split)      # no empty splits
    needs_mask = (num_splits * tiles_per_split * tile_n) != n

    def x_index_map(s, t):
        # Clamp so trailing tiles of an uneven split never index past the
        # array; their rows are masked out inside the kernel anyway.
        return (jnp.minimum(s * tiles_per_split + t, num_tiles - 1), 0)

    kernel = functools.partial(
        _attention_aggregator_kernel,
        tiles_per_split=tiles_per_split, tile_n=tile_n,
        n_rows=n, needs_mask=needs_mask)

    partial_m, partial_l, partial_acc = pl.pallas_call(
        kernel,
        out_shape=(
            jax.ShapeDtypeStruct((num_splits, 1, 1), jnp.float32),
            jax.ShapeDtypeStruct((num_splits, 1, 1), jnp.float32),
            jax.ShapeDtypeStruct((num_splits, 1, d_pad), jnp.float32),
        ),
        grid_spec=pltpu.PrefetchScalarGridSpec(
            num_scalar_prefetch=0,
            grid=(num_splits, tiles_per_split),
            in_specs=[
                pl.BlockSpec((tile_n, d_pad), x_index_map),
                pl.BlockSpec((d_pad, 1), lambda s, t: (0, 0)),
            ],
            out_specs=(
                pl.BlockSpec((1, 1, 1), lambda s, t: (s, 0, 0)),
                pl.BlockSpec((1, 1, 1), lambda s, t: (s, 0, 0)),
                pl.BlockSpec((1, 1, d_pad), lambda s, t: (s, 0, 0)),
            ),
            scratch_shapes=[
                pltpu.VMEM((1, 1), jnp.float32),
                pltpu.VMEM((1, 1), jnp.float32),
                pltpu.VMEM((1, d_pad), jnp.float32),
            ],
        ),
        compiler_params=pltpu.CompilerParams(
            dimension_semantics=("parallel", "arbitrary"),
            vmem_limit_bytes=64 * 1024 * 1024),
    )(embeddings, weight)

    # Cross-split log-sum-exp merge (tiny: S <= number of splits/cores).
    m = partial_m[:, 0, 0]                       # (S,)
    l = partial_l[:, 0, 0]                       # (S,)
    acc = partial_acc[:, 0, :]                   # (S, d_pad)
    m_glob = jnp.max(m)
    scale = jnp.exp(m - m_glob)                  # (S,)
    l_tot = jnp.sum(scale * l)
    acc_tot = jnp.sum(scale[:, None] * acc, axis=0)
    return (acc_tot[:d] / l_tot).astype(out_dtype)


def _reference(embeddings, weight, bias):
    scores = jnp.dot(embeddings, weight, precision=lax.Precision.HIGHEST) + bias
    attn = jax.nn.softmax(scores, axis=0)
    return jnp.sum(attn * embeddings, axis=0)


if __name__ == "__main__":
    root = jax.random.PRNGKey(0)

    def run_case(n, d, tile_n, num_splits, key):
        kx, kw, kb = jax.random.split(key, 3)
        emb = jax.random.normal(kx, (n, d), dtype=jnp.float32)
        w = jax.random.normal(kw, (d, 1), dtype=jnp.float32) / jnp.sqrt(d)
        b = jax.random.normal(kb, (), dtype=jnp.float32) * 0.01
        out = attention_aggregator(emb, w, b, tile_n=tile_n, num_splits=num_splits)
        jax.block_until_ready(out)
        ref = _reference(emb, w, b)
        assert out.shape == (d,)
        err = float(jnp.max(jnp.abs(out - ref)))
        assert jnp.allclose(out, ref, atol=1e-4, rtol=1e-4), (
            f"mismatch for N={n}, D={d}: max abs err {err}")

    k1, k2 = jax.random.split(root, 2)
    # Spec-sized case: seq=8, embedding_dim=32 (single tile; D padded to 128).
    run_case(8, 32, 512, 2, k1)
    # Multi-tile + partial-tile masking + D padding + 2-way split with LSE merge.
    run_case(300, 96, 128, 2, k2)

    print("KERNEL_OK")
</pallas_src>

<mosaic_0001>
module attributes {stable_mosaic.version = 11 : i64} {
  func.func @_attention_aggregator_kernel(%arg0: i32, %arg1: i32, %arg2: memref<8x128xf32, #tpu.memory_space<vmem>>, %arg3: memref<128x1xf32, #tpu.memory_space<vmem>>, %arg4: memref<1x1x1xf32, #tpu.memory_space<vmem>>, %arg5: memref<1x1x1xf32, #tpu.memory_space<vmem>>, %arg6: memref<1x1x128xf32, #tpu.memory_space<vmem>>, %arg7: memref<1x1xf32, #tpu.memory_space<vmem>>, %arg8: memref<1x1xf32, #tpu.memory_space<vmem>>, %arg9: memref<1x128xf32, #tpu.memory_space<vmem>>) attributes {dimension_semantics = [#tpu.dimension_semantics<parallel>, #tpu.dimension_semantics<arbitrary>], iteration_bounds = array<i64: 1, 1>, scalar_prefetch = 0 : i64, scratch_operands = 3 : i64, tpu.core_type = #tpu.core_type<tc>, window_params = [{transform_indices = @transform_0, window_bounds = array<i64: 8, 128>}, {pipeline_mode = #tpu.pipeline_mode<synchronous>, transform_indices = @transform_1, window_bounds = array<i64: 128, 1>}, {transform_indices = @transform_2, window_bounds = array<i64: 1, 1, 1>}, {transform_indices = @transform_3, window_bounds = array<i64: 1, 1, 1>}, {transform_indices = @transform_4, window_bounds = array<i64: 1, 1, 128>}]} {
    %c0_i32 = arith.constant 0 : i32
    %0 = arith.cmpi eq, %arg1, %c0_i32 : i32
    %1 = arith.extui %0 : i1 to i32
    %c0_i32_0 = arith.constant 0 : i32
    %2 = arith.cmpi ne, %1, %c0_i32_0 : i32
    scf.if %2 {
      %cst_21 = arith.constant -1.000000e+30 : f32
      %31 = vector.broadcast %cst_21 : f32 to vector<1x1xf32>
      %c0_22 = arith.constant 0 : index
      %c0_23 = arith.constant 0 : index
      %32 = vector.load %arg7[%c0_22, %c0_23] : memref<1x1xf32, #tpu.memory_space<vmem>>, vector<1x1xf32>
      tpu.vector_store %arg7[%c0_22, %c0_23], %31 {strides = array<i32>} : memref<1x1xf32, #tpu.memory_space<vmem>>, vector<1x1xf32>,
      %cst_24 = arith.constant 0.000000e+00 : f32
      %33 = vector.broadcast %cst_24 : f32 to vector<1x1xf32>
      %c0_25 = arith.constant 0 : index
      %c0_26 = arith.constant 0 : index
      %34 = vector.load %arg8[%c0_25, %c0_26] : memref<1x1xf32, #tpu.memory_space<vmem>>, vector<1x1xf32>
      tpu.vector_store %arg8[%c0_25, %c0_26], %33 {strides = array<i32>} : memref<1x1xf32, #tpu.memory_space<vmem>>, vector<1x1xf32>,
      %cst_27 = arith.constant 0.000000e+00 : f32
      %35 = vector.broadcast %cst_27 : f32 to vector<1x128xf32>
      %c0_28 = arith.constant 0 : index
      %c0_29 = arith.constant 0 : index
      %36 = vector.load %arg9[%c0_28, %c0_29] : memref<1x128xf32, #tpu.memory_space<vmem>>, vector<1x128xf32>
      tpu.vector_store %arg9[%c0_28, %c0_29], %35 {strides = array<i32>} : memref<1x128xf32, #tpu.memory_space<vmem>>, vector<1x128xf32>,
    } else {
    }
    %c0 = arith.constant 0 : index
    %c0_1 = arith.constant 0 : index
    %3 = vector.load %arg2[%c0, %c0_1] : memref<8x128xf32, #tpu.memory_space<vmem>>, vector<8x128xf32>
    %c0_2 = arith.constant 0 : index
    %c0_3 = arith.constant 0 : index
    %4 = vector.load %arg3[%c0_2, %c0_3] : memref<128x1xf32, #tpu.memory_space<vmem>>, vector<128x1xf32>
    %cst = arith.constant dense<0.000000e+00> : vector<8x1xf32>
    %5 = tpu.matmul %3, %4, %cst {dimension_numbers = #tpu.dot_dimension_numbers<[1], [0], [0], [1], [0, 0, 1, 1], [], []>} : vector<8x128xf32>, vector<128x1xf32>, vector<8x1xf32> -> vector<8x1xf32>
    %c0_4 = arith.constant 0 : index
    %c0_5 = arith.constant 0 : index
    %6 = vector.load %arg7[%c0_4, %c0_5] : memref<1x1xf32, #tpu.memory_space<vmem>>, vector<1x1xf32>
    %cst_6 = arith.constant dense<0xFF800000> : vector<1xf32>
    %7 = vector.multi_reduction <maximumf>, %5, %cst_6 [0] : vector<8x1xf32> to vector<1xf32>
    %8 = vector.shape_cast %7 : vector<1xf32> to vector<1x1xf32>
    %9 = arith.maximumf %6, %8 : vector<1x1xf32>
    %10 = arith.subf %6, %9 : vector<1x1xf32>
    %11 = math.exp %10 : vector<1x1xf32>
    %12 = vector.broadcast %9 : vector<1x1xf32> to vector<8x1xf32>
    %13 = arith.subf %5, %12 : vector<8x1xf32>
    %14 = math.exp %13 : vector<8x1xf32>
    %c0_7 = arith.constant 0 : index
    %c0_8 = arith.constant 0 : index
    %15 = vector.load %arg8[%c0_7, %c0_8] : memref<1x1xf32, #tpu.memory_space<vmem>>, vector<1x1xf32>
    %16 = arith.mulf %11, %15 : vector<1x1xf32>
    %cst_9 = arith.constant dense<0.000000e+00> : vector<1xf32>
    %17 = vector.multi_reduction <add>, %14, %cst_9 [0] : vector<8x1xf32> to vector<1xf32>
    %18 = vector.shape_cast %17 : vector<1xf32> to vector<1x1xf32>
    %19 = arith.addf %16, %18 : vector<1x1xf32>
    %c0_10 = arith.constant 0 : index
    %c0_11 = arith.constant 0 : index
    %20 = vector.load %arg8[%c0_10, %c0_11] : memref<1x1xf32, #tpu.memory_space<vmem>>, vector<1x1xf32>
    tpu.vector_store %arg8[%c0_10, %c0_11], %19 {strides = array<i32>} : memref<1x1xf32, #tpu.memory_space<vmem>>, vector<1x1xf32>,
    %cst_12 = arith.constant dense<0.000000e+00> : vector<1x128xf32>
    %21 = tpu.matmul %14, %3, %cst_12 {dimension_numbers = #tpu.dot_dimension_numbers<[0], [0], [1], [1], [0, 1, 1, 1], [], []>} : vector<8x1xf32>, vector<8x128xf32>, vector<1x128xf32> -> vector<1x128xf32>
    %c0_13 = arith.constant 0 : index
    %c0_14 = arith.constant 0 : index
    %22 = vector.load %arg9[%c0_13, %c0_14] : memref<1x128xf32, #tpu.memory_space<vmem>>, vector<1x128xf32>
    %23 = vector.broadcast %11 : vector<1x1xf32> to vector<1x128xf32>
    %24 = arith.mulf %23, %22 : vector<1x128xf32>
    %25 = arith.addf %24, %21 : vector<1x128xf32>
    %c0_15 = arith.constant 0 : index
    %c0_16 = arith.constant 0 : index
    %26 = vector.load %arg9[%c0_15, %c0_16] : memref<1x128xf32, #tpu.memory_space<vmem>>, vector<1x128xf32>
    tpu.vector_store %arg9[%c0_15, %c0_16], %25 {strides = array<i32>} : memref<1x128xf32, #tpu.memory_space<vmem>>, vector<1x128xf32>,
    %c0_17 = arith.constant 0 : index
    %c0_18 = arith.constant 0 : index
    %27 = vector.load %arg7[%c0_17, %c0_18] : memref<1x1xf32, #tpu.memory_space<vmem>>, vector<1x1xf32>
    tpu.vector_store %arg7[%c0_17, %c0_18], %9 {strides = array<i32>} : memref<1x1xf32, #tpu.memory_space<vmem>>, vector<1x1xf32>,
    %c0_i32_19 = arith.constant 0 : i32
    %28 = arith.cmpi eq, %arg1, %c0_i32_19 : i32
    %29 = arith.extui %28 : i1 to i32
    %c0_i32_20 = arith.constant 0 : i32
    %30 = arith.cmpi ne, %29, %c0_i32_20 : i32
    scf.if %30 {
      %c0_21 = arith.constant 0 : index
      %c0_22 = arith.constant 0 : index
      %31 = vector.load %arg7[%c0_21, %c0_22] : memref<1x1xf32, #tpu.memory_space<vmem>>, vector<1x1xf32>
      %c0_23 = arith.constant 0 : index
      %c0_24 = arith.constant 0 : index
      %c0_25 = arith.constant 0 : index
      %32 = vector.load %arg4[%c0_23, %c0_24, %c0_25] : memref<1x1x1xf32, #tpu.memory_space<vmem>>, vector<1x1x1xf32>
      %33 = vector.shape_cast %32 : vector<1x1x1xf32> to vector<1x1xf32>
      %34 = vector.shape_cast %31 : vector<1x1xf32> to vector<1x1x1xf32>
      tpu.vector_store %arg4[%c0_23, %c0_24, %c0_25], %34 {strides = array<i32>} : memref<1x1x1xf32, #tpu.memory_space<vmem>>, vector<1x1x1xf32>,
      %c0_26 = arith.constant 0 : index
      %c0_27 = arith.constant 0 : index
      %35 = vector.load %arg8[%c0_26, %c0_27] : memref<1x1xf32, #tpu.memory_space<vmem>>, vector<1x1xf32>
      %c0_28 = arith.constant 0 : index
      %c0_29 = arith.constant 0 : index
      %c0_30 = arith.constant 0 : index
      %36 = vector.load %arg5[%c0_28, %c0_29, %c0_30] : memref<1x1x1xf32, #tpu.memory_space<vmem>>, vector<1x1x1xf32>
      %37 = vector.shape_cast %36 : vector<1x1x1xf32> to vector<1x1xf32>
      %38 = vector.shape_cast %35 : vector<1x1xf32> to vector<1x1x1xf32>
      tpu.vector_store %arg5[%c0_28, %c0_29, %c0_30], %38 {strides = array<i32>} : memref<1x1x1xf32, #tpu.memory_space<vmem>>, vector<1x1x1xf32>,
      %c0_31 = arith.constant 0 : index
      %c0_32 = arith.constant 0 : index
      %39 = vector.load %arg9[%c0_31, %c0_32] : memref<1x128xf32, #tpu.memory_space<vmem>>, vector<1x128xf32>
      %c0_33 = arith.constant 0 : index
      %c0_34 = arith.constant 0 : index
      %c0_35 = arith.constant 0 : index
      %40 = vector.load %arg6[%c0_33, %c0_34, %c0_35] : memref<1x1x128xf32, #tpu.memory_space<vmem>>, vector<1x1x128xf32>
      %41 = vector.shape_cast %40 : vector<1x1x128xf32> to vector<1x128xf32>
      %42 = vector.shape_cast %39 : vector<1x128xf32> to vector<1x1x128xf32>
      tpu.vector_store %arg6[%c0_33, %c0_34, %c0_35], %42 {strides = array<i32>} : memref<1x1x128xf32, #tpu.memory_space<vmem>>, vector<1x1x128xf32>,
    } else {
    }
    return
  }
  func.func @transform_0(%arg0: i32, %arg1: i32) -> (i32, i32) {
    %c1_i32 = arith.constant 1 : i32
    %0 = arith.muli %arg0, %c1_i32 : i32
    %1 = arith.addi %0, %arg1 : i32
    %c0_i32 = arith.constant 0 : i32
    %2 = arith.minsi %1, %c0_i32 : i32
    %c0_i32_0 = arith.constant 0 : i32
    %c0_i32_1 = arith.constant 0 : i32
    return %2, %c0_i32_0 : i32, i32
  }
  func.func @transform_1(%arg0: i32, %arg1: i32) -> (i32, i32) {
    %c0_i32 = arith.constant 0 : i32
    %c0_i32_0 = arith.constant 0 : i32
    %c0_i32_1 = arith.constant 0 : i32
    return %c0_i32, %c0_i32_0 : i32, i32
  }
  func.func @transform_2(%arg0: i32, %arg1: i32) -> (i32, i32, i32) {
    %c0_i32 = arith.constant 0 : i32
    %c0_i32_0 = arith.constant 0 : i32
    %c0_i32_1 = arith.constant 0 : i32
    return %arg0, %c0_i32, %c0_i32_0 : i32, i32, i32
  }
  func.func @transform_3(%arg0: i32, %arg1: i32) -> (i32, i32, i32) {
    %c0_i32 = arith.constant 0 : i32
    %c0_i32_0 = arith.constant 0 : i32
    %c0_i32_1 = arith.constant 0 : i32
    return %arg0, %c0_i32, %c0_i32_0 : i32, i32, i32
  }
  func.func @transform_4(%arg0: i32, %arg1: i32) -> (i32, i32, i32) {
    %c0_i32 = arith.constant 0 : i32
    %c0_i32_0 = arith.constant 0 : i32
    %c0_i32_1 = arith.constant 0 : i32
    return %arg0, %c0_i32, %c0_i32_0 : i32, i32, i32
  }
}

</mosaic_0001>

<llo_original>
// kernel: tpu_custom_call.1
$region0: #{tpu_custom_call.1}
  #allocation0 [shape = 'u32[]', space=smem, size = 0x4, offset = 0x4, fixed_abs, tag = 'smem constant byte address 0x4 - core index']
  #allocation1 [shape = 'u32[144,128]{1,0:T(1,128)}', space=vmem, size = 0x12000, scoped, tag = 'internal scratch']
  #allocation2 [shape = 'f32[1,1]{1,0:T(1,128)}', space=vmem, size = 0x200, scoped, tag = 'scratch operand']
  #allocation3 [shape = 'f32[1,1]{1,0:T(1,128)}', space=vmem, size = 0x200, scoped, tag = 'scratch operand']
  #allocation4 [shape = 'f32[1,128]{1,0:T(1,128)}', space=vmem, size = 0x200, scoped, tag = 'scratch operand']
  %s0 = inlined_call_operand.hbm [shape: f32[8,128], index: 0, kind: input, shape index: {}]
  %s1 = inlined_call_operand.hbm [shape: f32[128,1], index: 1, kind: input, shape index: {}]
  %s2 = inlined_call_operand.hbm [shape: f32[1,1,1], index: 2, kind: output, shape index: {0}]
  %s3 = inlined_call_operand.hbm [shape: f32[1,1,1], index: 3, kind: output, shape index: {1}]
  %s4 = inlined_call_operand.hbm [shape: f32[1,1,128], index: 4, kind: output, shape index: {2}]
  %5 = xla_tuple %s2, %s3, %s4
  %s6 = sld [smem:[#allocation0]]
  $region50: #{tpu_custom_call.1} parent=0
    _
  %s8 = ssub.s32 1, %s6
  %s9 = scalar_select 0, %s8, %s6
  $region1: #{tpu_custom_call.1} parent=0
    #allocation5 [shape = 'u8[4096]{0}', space=vmem, size = 0x1000, scoped, tag = 'input window, operand 0, single buffered']
    #allocation6 [shape = 's32[1]{0}', space=sflag, size = 0x4, scoped, tag = 'scoped memory for tpu_custom_call.1']
    #allocation7 [shape = 's32[1]{0}', space=sflag, size = 0x4, scoped, tag = 'scoped memory for tpu_custom_call.1']
    #allocation8 [shape = 'u8[65536]{0}', space=vmem, size = 0x10000, scoped, tag = 'input window, operand 1, single buffered']
    #allocation9 [shape = 's32[1]{0}', space=sflag, size = 0x4, scoped, tag = 'scoped memory for tpu_custom_call.1']
    #allocation10 [shape = 'u8[512]{0}', space=vmem, size = 0x400, scoped, tag = 'output window, operand 0, single buffered']
    #allocation11 [shape = 'u8[512]{0}', space=vmem, size = 0x400, scoped, tag = 'output window, operand 1, single buffered']
    #allocation12 [shape = 's32[1]{0}', space=sflag, size = 0x4, scoped, tag = 'scoped memory for tpu_custom_call.1']
    #allocation13 [shape = 'u8[512]{0}', space=vmem, size = 0x400, scoped, tag = 'output window, operand 2, single buffered']
    %10 = vsyncpa [#allocation6], 0
    %11 = vsyncpa [#allocation9], 0
    %12 = vsyncpa [#allocation7], 0
    %13 = vsyncpa [#allocation12], 0
    // Predicated region
    $region2: #{tpu_custom_call.1} parent=1 // pred_check
      _
    $region3: #{tpu_custom_call.1} parent=1 // pred_check_branch
      %15 = sbr.rel (0) target = $region5
    $region4: #{tpu_custom_call.1} parent=1 // pred_region
      %s16 = sadd.s32 0, 0
      %p17 = scmp.lt.s32.totalorder %s16, 0
      %s18 = scalar_select %p17, %s16, 0
      %s20 = ssub.s32 128, 128
      %21 = vsyncadd [#allocation6], %s20
      %s22 = smul.addr %s18, 128
      %s23 = scalar_lea.hbm %s0, %s22
      %s25 = sshll.u32 [#allocation5], 4
      %s26 = int_to_ptr.vmem [resolvable:$true] %s25
      %28 = dma.hbm_to_vmem [thread:$0]  %s23, 128, %s26, [#allocation6]
    $region5: #{tpu_custom_call.1} parent=1 // pred_fallthru
      _
    // Predicated region
    $region6: #{tpu_custom_call.1} parent=1 // pred_check
      _
    $region7: #{tpu_custom_call.1} parent=1 // pred_check_branch
      %30 = sbr.rel (0) target = $region9
    $region8: #{tpu_custom_call.1} parent=1 // pred_region
      %s32 = ssub.s32 2048, 2048
      %33 = vsyncadd [#allocation9], %s32
      %s34 = sshll.u32 [#allocation8], 4
      %s35 = int_to_ptr.vmem [resolvable:$true] %s34
      %40 = dma.hbm_to_vmem [thread:$0]  %s1, 2048, %s35, [#allocation9], 128, 128, 8
    $region9: #{tpu_custom_call.1} parent=1 // pred_fallthru
      _
    // Predicated region
    $region10: #{tpu_custom_call.1} parent=1 // pred_check
      _
    $region11: #{tpu_custom_call.1} parent=1 // pred_check_branch
      %42 = sbr.rel (0) target = $region13
    $region12: #{tpu_custom_call.1} parent=1 // pred_region
      %43 = dma.done [#allocation6], 128
    $region13: #{tpu_custom_call.1} parent=1 // pred_fallthru
      _
    // Predicated region
    $region14: #{tpu_custom_call.1} parent=1 // pred_check
      _
    $region15: #{tpu_custom_call.1} parent=1 // pred_check_branch
      %45 = sbr.rel (0) target = $region17
    $region16: #{tpu_custom_call.1} parent=1 // pred_region
      %46 = dma.done [#allocation9], 2048
    $region17: #{tpu_custom_call.1} parent=1 // pred_fallthru
      _
    %s47 = sadd.s32 0, 0
    %p48 = scmp.lt.s32.totalorder %s47, 0
    %s49 = scalar_select %p48, %s47, 0
    %p50 = scmp.eq.s32.totalorder 0, 0
    // Predicated region
    $region18: #{tpu_custom_call.1} parent=1 // pred_check
      %p51 = pneg %p50
    $region19: #{tpu_custom_call.1} parent=1 // pred_check_branch
      %53 = sbr.rel (%p51) target = $region21
    $region20: #{tpu_custom_call.1} parent=1 // pred_region
      %vm54 = vcmask 0
      %55 = vst.msk [vmem:[#allocation2] sm:$0x1] %vm54, -1e+30
      %56 = vst.msk [vmem:[#allocation3] sm:$0x1] %vm54, 0.0
      %57 = vst [vmem:[#allocation4] sm:$0x1] 0.0
    $region21: #{tpu_custom_call.1} parent=1 // pred_fallthru
      _
    %v58 = vld [vmem:[#allocation5] sm:$0xff]
    %v59 = vld [vmem:[#allocation8] sm:$0xff]
    %v60 = vld [vmem:[#allocation8 + $0x8] sm:$0xff]
    %v61 = vld [vmem:[#allocation8 + $0x10] sm:$0xff]
    %v62 = vld [vmem:[#allocation8 + $0x18] sm:$0xff]
    %v63 = vld [vmem:[#allocation8 + $0x20] sm:$0xff]
    %v64 = vld [vmem:[#allocation8 + $0x28] sm:$0xff]
    %v65 = vld [vmem:[#allocation8 + $0x30] sm:$0xff]
    %v66 = vld [vmem:[#allocation8 + $0x38] sm:$0xff]
    %v67 = vld [vmem:[#allocation8 + $0x40] sm:$0xff]
    %v68 = vld [vmem:[#allocation8 + $0x48] sm:$0xff]
    %v69 = vld [vmem:[#allocation8 + $0x50] sm:$0xff]
    %v70 = vld [vmem:[#allocation8 + $0x58] sm:$0xff]
    %v71 = vld [vmem:[#allocation8 + $0x60] sm:$0xff]
    %v72 = vld [vmem:[#allocation8 + $0x68] sm:$0xff]
    %v73 = vld [vmem:[#allocation8 + $0x70] sm:$0xff]
    %v74 = vld [vmem:[#allocation8 + $0x78] sm:$0xff]
    %75 = vmatprep.subr.mxu0 0.0
    %76 = vmatpush1.msra.mxu0 %v59
    %77 = vmatprep.subr.mxu0 0.0
    %78 = vmatpush1.msra.mxu0 %v60
    %79 = vmatprep.subr.mxu0 0.0
    %80 = vmatpush1.msra.mxu0 %v61
    %81 = vmatprep.subr.mxu0 0.0
    %82 = vmatpush1.msra.mxu0 %v62
    %83 = vmatprep.subr.mxu0 0.0
    %84 = vmatpush1.msra.mxu0 %v63
    %85 = vmatprep.subr.mxu0 0.0
    %86 = vmatpush1.msra.mxu0 %v64
    %87 = vmatprep.subr.mxu0 0.0
    %88 = vmatpush1.msra.mxu0 %v65
    %89 = vmatprep.subr.mxu0 0.0
    %90 = vmatpush1.msra.mxu0 %v66
    %91 = vmatprep.subr.mxu0 0.0
    %92 = vmatpush1.msra.mxu0 %v67
    %93 = vmatprep.subr.mxu0 0.0
    %94 = vmatpush1.msra.mxu0 %v68
    %95 = vmatprep.subr.mxu0 0.0
    %96 = vmatpush1.msra.mxu0 %v69
    %97 = vmatprep.subr.mxu0 0.0
    %98 = vmatpush1.msra.mxu0 %v70
    %99 = vmatprep.subr.mxu0 0.0
    %100 = vmatpush1.msra.mxu0 %v71
    %101 = vmatprep.subr.mxu0 0.0
    %102 = vmatpush1.msra.mxu0 %v72
    %103 = vmatprep.subr.mxu0 0.0
    %104 = vmatpush1.msra.mxu0 %v73
    %105 = vmatprep.subr.mxu0 0.0
    %106 = vmatpush1.msra.mxu0 %v74
    %107 = vmatprep.subr.mxu0 0.0
    %108 = vmatpush1.msra.mxu0 0.0
    %109 = vmatprep.subr.mxu0 0.0
    %110 = vmatpush1.msra.mxu0 0.0
    %111 = vmatprep.subr.mxu0 0.0
    %112 = vmatpush1.msra.mxu0 0.0
    %113 = vmatprep.subr.mxu0 0.0
    %114 = vmatpush1.msra.mxu0 0.0
    %115 = vmatprep.subr.mxu0 0.0
    %116 = vmatpush1.msra.mxu0 0.0
    %117 = vmatprep.subr.mxu0 0.0
    %118 = vmatpush1.msra.mxu0 0.0
    %119 = vmatprep.subr.mxu0 0.0
    %120 = vmatpush1.msra.mxu0 0.0
    %121 = vmatprep.subr.mxu0 0.0
    %122 = vmatpush1.msra.mxu0 0.0
    %123 = vmatprep.subr.mxu0 0.0
    %124 = vmatpush1.msra.mxu0 0.0
    %125 = vmatprep.subr.mxu0 0.0
    %126 = vmatpush1.msra.mxu0 0.0
    %127 = vmatprep.subr.mxu0 0.0
    %128 = vmatpush1.msra.mxu0 0.0
    %129 = vmatprep.subr.mxu0 0.0
    %130 = vmatpush1.msra.mxu0 0.0
    %131 = vmatprep.subr.mxu0 0.0
    %132 = vmatpush1.msra.mxu0 0.0
    %133 = vmatprep.subr.mxu0 0.0
    %134 = vmatpush1.msra.mxu0 0.0
    %135 = vmatprep.subr.mxu0 0.0
    %136 = vmatpush1.msra.mxu0 0.0
    %137 = vmatprep.subr.mxu0 0.0
    %138 = vmatpush1.msra.mxu0 0.0
    %139 = vmatprep.mubr.f32.mxu0 0.0
    %140 = vmatmul.mubr.f32.gmra.mrb[0].mxu0 %v58
    %v141 = vpop.f32.mrb[0].mxu0
    %v142 = vadd.f32 0.0, %v141
    %v143 = vpop.f32.mrb[0].mxu0
    %144 = vdwg.mxu0
    %v145 = vld [vmem:[#allocation2] sm:$0x1]
    %vm146 = vcmask 7168
    %v147 = vsel %vm146, %v142, -inf
    %v148 = vrot.slane %v147, 4
    %v149 = vmax.f32 %v147, %v148
    %v150 = vrot.slane %v149, 2
    %v151 = vmax.f32 %v149, %v150
    %v152 = vrot.slane %v151, 1
    %v153 = vmax.f32 %v151, %v152
    %v154 = vmax.f32 %v145, %v153
    %v155 = vsub.f32 %v145, %v154
    %v156 = vmul.f32 %v155, 1.442695
    %v157 = vpow.pop %v156
    %v159 = vlaneseq
    %v160 = vshrl.u32 %v159, 7
    %v161 = vsub.s32 0, %v160
    %v162 = vrot.slane %v154, %v161
    %v164 = vsub.f32 %v142, %v162
    %v165 = vmul.f32 %v164, 1.442695
    %v166 = vpow.pop %v165
    %v167 = vld [vmem:[#allocation3] sm:$0x1]
    %v168 = vmul.f32 %v157, %v167
    %v169 = vsel %vm146, %v166, 0.0
    %v170 = vrot.slane %v169, 4
    %v171 = vadd.f32 %v169, %v170
    %v172 = vrot.slane %v171, 2
    %v173 = vadd.f32 %v171, %v172
    %v174 = vrot.slane %v173, 1
    %v175 = vadd.f32 %v173, %v174
    %v176 = vadd.f32 %v168, %v175
    %vm177 = vcmask 0
    %178 = vst.msk [vmem:[#allocation3] sm:$0x1] %vm177, %v176
    %179 = vxpose.xlu0.b32.start [1/16] %v166, 128
    %180 = vxpose.xlu0.b32.cont [2/16] 0.0, 128
    %181 = vxpose.xlu0.b32.cont [3/16] 0.0, 128
    %182 = vxpose.xlu0.b32.cont [4/16] 0.0, 128
    %183 = vxpose.xlu0.b32.cont [5/16] 0.0, 128
    %184 = vxpose.xlu0.b32.cont [6/16] 0.0, 128
    %185 = vxpose.xlu0.b32.cont [7/16] 0.0, 128
    %186 = vxpose.xlu0.b32.cont [8/16] 0.0, 128
    %187 = vxpose.xlu0.b32.cont [9/16] 0.0, 128
    %188 = vxpose.xlu0.b32.cont [10/16] 0.0, 128
    %189 = vxpose.xlu0.b32.cont [11/16] 0.0, 128
    %190 = vxpose.xlu0.b32.cont [12/16] 0.0, 128
    %191 = vxpose.xlu0.b32.cont [13/16] 0.0, 128
    %192 = vxpose.xlu0.b32.cont [14/16] 0.0, 128
    %193 = vxpose.xlu0.b32.cont [15/16] 0.0, 128
    %194 = vxpose.xlu0.b32.end [16/16] 0.0, 128
    %v195 = vpop.trf.xlu0
    %v196 = vpop.trf.xlu0
    %v197 = vpop.trf.xlu0
    %v198 = vpop.trf.xlu0
    %v199 = vpop.trf.xlu0
    %v200 = vpop.trf.xlu0
    %v201 = vpop.trf.xlu0
    %v202 = vpop.trf.xlu0
    %v203 = vpop.trf.xlu0
    %v204 = vpop.trf.xlu0
    %v205 = vpop.trf.xlu0
    %v206 = vpop.trf.xlu0
    %v207 = vpop.trf.xlu0
    %v208 = vpop.trf.xlu0
    %v209 = vpop.trf.xlu0
    %v210 = vpop.trf.xlu0
    %vm211 = vcmask 64512
    %v213 = vsel %vm211, %v195, 0
    %215 = vmatprep.subr.mxu0 0.0
    %216 = vmatpush1.msra.mxu0 %v58
    %217 = vmatprep.subr.mxu0 0.0
    %218 = vmatpush1.msra.mxu0 0.0
    %219 = vmatprep.subr.mxu0 0.0
    %220 = vmatpush1.msra.mxu0 0.0
    %221 = vmatprep.subr.mxu0 0.0
    %222 = vmatpush1.msra.mxu0 0.0
    %223 = vmatprep.subr.mxu0 0.0
    %224 = vmatpush1.msra.mxu0 0.0
    %225 = vmatprep.subr.mxu0 0.0
    %226 = vmatpush1.msra.mxu0 0.0
    %227 = vmatprep.subr.mxu0 0.0
    %228 = vmatpush1.msra.mxu0 0.0
    %229 = vmatprep.subr.mxu0 0.0
    %230 = vmatpush1.msra.mxu0 0.0
    %231 = vmatprep.subr.mxu0 0.0
    %232 = vmatpush1.msra.mxu0 0.0
    %233 = vmatprep.subr.mxu0 0.0
    %234 = vmatpush1.msra.mxu0 0.0
    %235 = vmatprep.subr.mxu0 0.0
    %236 = vmatpush1.msra.mxu0 0.0
    %237 = vmatprep.subr.mxu0 0.0
    %238 = vmatpush1.msra.mxu0 0.0
    %239 = vmatprep.subr.mxu0 0.0
    %240 = vmatpush1.msra.mxu0 0.0
    %241 = vmatprep.subr.mxu0 0.0
    %242 = vmatpush1.msra.mxu0 0.0
    %243 = vmatprep.subr.mxu0 0.0
    %244 = vmatpush1.msra.mxu0 0.0
    %245 = vmatprep.subr.mxu0 0.0
    %246 = vmatpush1.msra.mxu0 0.0
    %247 = vmatprep.subr.mxu0 0.0
    %248 = vmatpush1.msra.mxu0 0.0
    %249 = vmatprep.subr.mxu0 0.0
    %250 = vmatpush1.msra.mxu0 0.0
    %251 = vmatprep.subr.mxu0 0.0
    %252 = vmatpush1.msra.mxu0 0.0
    %253 = vmatprep.subr.mxu0 0.0
    %254 = vmatpush1.msra.mxu0 0.0
    %255 = vmatprep.subr.mxu0 0.0
    %256 = vmatpush1.msra.mxu0 0.0
    %257 = vmatprep.subr.mxu0 0.0
    %258 = vmatpush1.msra.mxu0 0.0
    %259 = vmatprep.subr.mxu0 0.0
    %260 = vmatpush1.msra.mxu0 0.0
    %261 = vmatprep.subr.mxu0 0.0
    %262 = vmatpush1.msra.mxu0 0.0
    %263 = vmatprep.subr.mxu0 0.0
    %264 = vmatpush1.msra.mxu0 0.0
    %265 = vmatprep.subr.mxu0 0.0
    %266 = vmatpush1.msra.mxu0 0.0
    %267 = vmatprep.subr.mxu0 0.0
    %268 = vmatpush1.msra.mxu0 0.0
    %269 = vmatprep.subr.mxu0 0.0
    %270 = vmatpush1.msra.mxu0 0.0
    %271 = vmatprep.subr.mxu0 0.0
    %272 = vmatpush1.msra.mxu0 0.0
    %273 = vmatprep.subr.mxu0 0.0
    %274 = vmatpush1.msra.mxu0 0.0
    %275 = vmatprep.subr.mxu0 0.0
    %276 = vmatpush1.msra.mxu0 0.0
    %277 = vmatprep.subr.mxu0 0.0
    %278 = vmatpush1.msra.mxu0 0.0
    %279 = vmatprep.mubr.f32.mxu0 0.0
    %280 = vmatmul.mubr.f32.gmra.mrb[0].mxu0 %v213
    %v281 = vpop.f32.mrb[0].mxu0
    %v282 = vadd.f32 0.0, %v281
    %v283 = vpop.f32.mrb[0].mxu0
    %284 = vdwg.mxu0
    %v285 = vld [vmem:[#allocation4] sm:$0x1]
    %287 = vset.pattern.permute.xlu0 0
    %288 = vperm.xlu0 %287, %v157
    %v289 = vpop.permute.xlu0 %288
    %v291 = vlaneseq
    %v292 = vshrl.u32 %v291, 7
    %v293 = vsub.s32 0, %v292
    %v294 = vrot.slane %v289, %v293
    %v295 = vmul.f32 %v294, %v285
    %v296 = vadd.f32 %v295, %v282
    %297 = vst [vmem:[#allocation4] sm:$0x1] %v296
    %298 = vst.msk [vmem:[#allocation2] sm:$0x1] %vm177, %v154
    // Predicated region
    $region22: #{tpu_custom_call.1} parent=1 // pred_check
      %p299 = pneg %p50
    $region23: #{tpu_custom_call.1} parent=1 // pred_check_branch
      %301 = sbr.rel (%p299) target = $region25
    $region24: #{tpu_custom_call.1} parent=1 // pred_region
      %v302 = vld [vmem:[#allocation2] sm:$0x1]
      %303 = vst.msk [vmem:[#allocation10] sm:$0x1] %vm177, %v302
      %v304 = vld [vmem:[#allocation3] sm:$0x1]
      %305 = vst.msk [vmem:[#allocation11] sm:$0x1] %vm177, %v304
      %v306 = vld [vmem:[#allocation4] sm:$0x1]
      %307 = vst [vmem:[#allocation13] sm:$0x1] %v306
    $region25: #{tpu_custom_call.1} parent=1 // pred_fallthru
      _
    // Predicated region
    $region26: #{tpu_custom_call.1} parent=1 // pred_check
      _
    $region27: #{tpu_custom_call.1} parent=1 // pred_check_branch
      %309 = sbr.rel (0) target = $region29
    $region28: #{tpu_custom_call.1} parent=1 // pred_region
      %s311 = ssub.s32 16, 16
      %312 = vsyncadd [#allocation7], %s311
      %s314 = sshll.u32 [#allocation10], 4
      %s315 = int_to_ptr.vmem [resolvable:$true] %s314
      %317 = dma.vmem_to_hbm [thread:$0]  %s315, 16, %s2, [#allocation7]
    $region29: #{tpu_custom_call.1} parent=1 // pred_fallthru
      _
    // Predicated region
    $region30: #{tpu_custom_call.1} parent=1 // pred_check
      _
    $region31: #{tpu_custom_call.1} parent=1 // pred_check_branch
      %319 = sbr.rel (0) target = $region33
    $region32: #{tpu_custom_call.1} parent=1 // pred_region
      %s321 = ssub.s32 16, 16
      %322 = vsyncadd [#allocation12], %s321
      %s324 = sshll.u32 [#allocation11], 4
      %s325 = int_to_ptr.vmem [resolvable:$true] %s324
      %327 = dma.vmem_to_hbm [thread:$0]  %s325, 16, %s3, [#allocation12]
    $region33: #{tpu_custom_call.1} parent=1 // pred_fallthru
      _
    // Predicated region
    $region34: #{tpu_custom_call.1} parent=1 // pred_check
      _
    $region35: #{tpu_custom_call.1} parent=1 // pred_check_branch
      %329 = sbr.rel (0) target = $region37
    $region36: #{tpu_custom_call.1} parent=1 // pred_region
      %s331 = ssub.s32 16, 16
      %332 = vsyncadd [#allocation12], %s331
      %s334 = sshll.u32 [#allocation13], 4
      %s335 = int_to_ptr.vmem [resolvable:$true] %s334
      %337 = dma.vmem_to_hbm [thread:$0]  %s335, 16, %s4, [#allocation12]
    $region37: #{tpu_custom_call.1} parent=1 // pred_fallthru
      _
    // Predicated region
    $region38: #{tpu_custom_call.1} parent=1 // pred_check
      _
    $region39: #{tpu_custom_call.1} parent=1 // pred_check_branch
      %339 = sbr.rel (0) target = $region41
    $region40: #{tpu_custom_call.1} parent=1 // pred_region
      %340 = dma.done [#allocation7], 16
    $region41: #{tpu_custom_call.1} parent=1 // pred_fallthru
      _
    // Predicated region
    $region42: #{tpu_custom_call.1} parent=1 // pred_check
      _
    $region43: #{tpu_custom_call.1} parent=1 // pred_check_branch
      %342 = sbr.rel (0) target = $region45
    $region44: #{tpu_custom_call.1} parent=1 // pred_region
      %343 = dma.done [#allocation12], 16
    $region45: #{tpu_custom_call.1} parent=1 // pred_fallthru
      _
    // Predicated region
    $region46: #{tpu_custom_call.1} parent=1 // pred_check
      _
    $region47: #{tpu_custom_call.1} parent=1 // pred_check_branch
      %345 = sbr.rel (0) target = $region49
    $region48: #{tpu_custom_call.1} parent=1 // pred_region
      %346 = dma.done [#allocation12], 16
    $region49: #{tpu_custom_call.1} parent=1 // pred_fallthru
      _
    %347 = vsyncpa [#allocation6], 1
    %348 = vsyncpa [#allocation9], 1
    %349 = vsyncpa [#allocation7], 1
    %350 = vsyncpa [#allocation12], 1

</llo_original>
